<compile_context>
chip_gen: v5e
topology: v5e:2x2
jax: 0.10.0
libtpu: 0.0.40
codegen_flags: <defaults>
</compile_context>

<pallas_src>
import jax
import jax.numpy as jnp
from jax.experimental import pallas as pl
from jax.experimental.pallas import tpu as pltpu


def _round_up(v, m):
    return ((v + m - 1) // m) * m


def _dirs_kernel(cam_ref, xy_ref, dirs_ref):
    """One (ray-tile, camera) grid step: unit-norm ray directions.

    cam_ref : SMEM (B*13,)       flat per-camera params
                                 [R row-major (9), 1/fx, 1/fy, px, py]
    xy_ref  : VMEM (2, TS, 128)  NDC pixel coords, rays packed (sublane, lane)
    dirs_ref: VMEM (3, TS, 128)  unit-norm ray directions (channel-first)
    """
    b = pl.program_id(1)          # camera index = innermost grid axis
    base = b * 13

    x = xy_ref[0]                 # (TS, 128) — full-vreg slabs, 8/8 sublanes
    y = xy_ref[1]

    ifx = cam_ref[base + 9]
    ify = cam_ref[base + 10]
    px = cam_ref[base + 11]
    py = cam_ref[base + 12]

    # unproject onto the depth=1 plane in camera space
    c1x = (x - px) * ifx
    c1y = (y - py) * ify

    # directions = R @ (c1x, c1y, 1) — scalar-broadcast FMAs on the VPU
    # (a 3x3 contraction is far too small for the MXU; do NOT use jnp.dot here)
    dx = cam_ref[base + 0] * c1x + cam_ref[base + 1] * c1y + cam_ref[base + 2]
    dy = cam_ref[base + 3] * c1x + cam_ref[base + 4] * c1y + cam_ref[base + 5]
    dz = cam_ref[base + 6] * c1x + cam_ref[base + 7] * c1y + cam_ref[base + 8]

    # F.normalize(dirs, dim=-1): dirs / max(||dirs||, 1e-12)   (rsqrt -> EUP)
    inv = jax.lax.rsqrt(jnp.maximum(dx * dx + dy * dy + dz * dz, 1e-24))

    # three full (TS, 128) unmasked slab stores (no masked single-row writes)
    dirs_ref[0] = dx * inv
    dirs_ref[1] = dy * inv
    dirs_ref[2] = dz * inv


def nerf_raysampler_forward(R, T, focal, principal, *, image_height, image_width,
                            n_pts_per_ray, min_depth, max_depth,
                            chunksize=None, chunk_idx=0, channel_first=False):
    """Eval-mode forward of NeRFRaysampler (grid raysampler + normalize + chunk).

    Returns (origins, directions, lengths, xys) with the RayBundle shapes
    (B, n_rays, 3/3/n_pts/2).  With channel_first=True, `directions` is returned
    as (B, 3, n_rays) to avoid the post-kernel transpose pass.
    """
    B = R.shape[0]
    H, W = image_height, image_width
    n_pixels = H * W

    # ---- eval-mode chunk selection, applied up-front (only the chunk is computed)
    if chunksize is None:
        chunksize = n_pixels
    start = chunk_idx * chunksize
    if chunk_idx < 0 or start >= n_pixels:
        raise ValueError(
            f"chunk_idx={chunk_idx} out of range for chunksize={chunksize}, "
            f"n_pixels={n_pixels}")
    end = min(start + chunksize, n_pixels)
    n_sel = end - start

    # ---- NDC xy grid (camera-independent), exactly as NDCMultinomialRaysampler
    if W >= H:
        range_x, range_y = W / H, 1.0
    else:
        range_x, range_y = 1.0, H / W
    half_px, half_py = range_x / W, range_y / H
    xs = jnp.linspace(range_x - half_px, -range_x + half_px, W, dtype=jnp.float32)
    ys = jnp.linspace(range_y - half_py, -range_y + half_py, H, dtype=jnp.float32)
    X, Y = jnp.meshgrid(xs, ys)                                      # (H, W)
    xy = jnp.stack([X, Y], axis=-1).reshape(n_pixels, 2)[start:end]  # (n_sel, 2)

    # ---- tiling: rays packed into (rows, 128) vreg slabs; rows/tile multiple of 8
    LANES = 128
    MAX_TS = 512                                   # 512 rows * 128 lanes = 64K rays
    n_rows = -(-n_sel // LANES)
    n_rows8 = _round_up(max(n_rows, 1), 8)
    n_tiles = -(-n_rows8 // MAX_TS)
    TS = _round_up(-(-n_rows8 // n_tiles), 8)
    n_rows_pad = n_tiles * TS
    n_pad = n_rows_pad * LANES

    xy_packed = jnp.pad(
        xy.T.astype(jnp.float32), ((0, 0), (0, n_pad - n_sel))
    ).reshape(2, n_rows_pad, LANES)

    # ---- camera params, flat 1D for SMEM: [R (9, row-major), 1/fx, 1/fy, px, py]
    cam = jnp.concatenate(
        [R.reshape(B, 9),
         1.0 / focal.reshape(B, 2),
         principal.reshape(B, 2)], axis=-1
    ).astype(jnp.float32).reshape(B * 13)

    dirs_packed = pl.pallas_call(
        _dirs_kernel,
        out_shape=jax.ShapeDtypeStruct((B, 3, n_rows_pad, LANES), jnp.float32),
        grid=(n_tiles, B),                 # camera innermost -> xy tile reused
        in_specs=[
            pl.BlockSpec(memory_space=pltpu.MemorySpace.SMEM),
            pl.BlockSpec((2, TS, LANES), lambda j, b: (0, j, 0)),
        ],
        out_specs=pl.BlockSpec((None, 3, TS, LANES), lambda j, b: (b, 0, j, 0)),
        compiler_params=pltpu.CompilerParams(
            dimension_semantics=("parallel", "parallel")),
    )(cam, xy_packed)

    # (B, 3, rows, 128) -> (B, 3, n_pad) is a free contiguous reshape;
    # slice the padding off in the lane-dense layout.
    dirs_cn = dirs_packed.reshape(B, 3, n_pad)[:, :, :n_sel]      # (B, 3, n_sel)

    if channel_first:
        directions = dirs_cn
    else:
        # full-tensor transpose back to the PyTorch RayBundle layout; skip it by
        # passing channel_first=True if the consumer accepts (B, 3, n_rays).
        directions = jnp.transpose(dirs_cn, (0, 2, 1))            # (B, n_sel, 3)

    # origins = -R @ T : constant per camera (algebraic identity of the grid path)
    origins = (-jnp.einsum('bji,bi->bj', R, T)).astype(jnp.float32)
    origins = jnp.broadcast_to(origins[:, None, :], (B, n_sel, 3))

    # lengths: constant linspace; xys: the NDC grid chunk.  These broadcasts are
    # lazy — downstream code should not force materialization of `lengths`.
    depths = jnp.linspace(min_depth, max_depth, n_pts_per_ray, dtype=jnp.float32)
    lengths = jnp.broadcast_to(depths, (B, n_sel, n_pts_per_ray))
    xys = jnp.broadcast_to(xy[None].astype(jnp.float32), (B, n_sel, 2))

    return origins, directions, lengths, xys


def _reference(R, T, focal, principal, H, W, n_pts, min_depth, max_depth):
    """Pure-JAX reference mirroring the PyTorch3D grid raysampler math."""
    B = R.shape[0]
    if W >= H:
        range_x, range_y = W / H, 1.0
    else:
        range_x, range_y = 1.0, H / W
    half_px, half_py = range_x / W, range_y / H
    xs = jnp.linspace(range_x - half_px, -range_x + half_px, W, dtype=jnp.float32)
    ys = jnp.linspace(range_y - half_py, -range_y + half_py, H, dtype=jnp.float32)
    X, Y = jnp.meshgrid(xs, ys)                 # (H, W)
    xy = jnp.stack([X, Y], -1).reshape(-1, 2)   # (N, 2)
    N = xy.shape[0]
    fx = focal[:, 0][:, None]
    fy = focal[:, 1][:, None]
    px = principal[:, 0][:, None]
    py = principal[:, 1][:, None]
    c1 = jnp.stack([(xy[None, :, 0] - px) / fx,
                    (xy[None, :, 1] - py) / fy,
                    jnp.ones((B, N), jnp.float32)], -1)
    c2 = 2.0 * c1
    w1 = jnp.einsum('bni,bji->bnj', c1 - T[:, None, :], R)
    w2 = jnp.einsum('bni,bji->bnj', c2 - T[:, None, :], R)
    dirs = w2 - w1
    orig = w1 - dirs
    nrm = jnp.sqrt(jnp.sum(dirs * dirs, -1, keepdims=True))
    dirs = dirs / jnp.maximum(nrm, 1e-12)
    depths = jnp.linspace(min_depth, max_depth, n_pts, dtype=jnp.float32)
    lengths = jnp.broadcast_to(depths, (B, N, n_pts))
    xys = jnp.broadcast_to(xy, (B, N, 2))
    return orig, dirs, lengths, xys


if __name__ == "__main__":
    key = jax.random.PRNGKey(0)
    B, H, W, NPTS = 2, 8, 16, 8
    MIN_D, MAX_D = 0.1, 4.0

    k1, k2, k3, k4 = jax.random.split(key, 4)
    A = jax.random.normal(k1, (B, 3, 3), jnp.float32)
    R, _ = jnp.linalg.qr(A)                       # deterministic orthonormal rotations
    R = R.astype(jnp.float32)
    T = 0.5 * jax.random.normal(k2, (B, 3), jnp.float32)
    focal = 1.0 + 0.5 * jax.random.uniform(k3, (B, 2), jnp.float32)
    principal = 0.1 * jax.random.normal(k4, (B, 2), jnp.float32)

    outs = nerf_raysampler_forward(
        R, T, focal, principal,
        image_height=H, image_width=W,
        n_pts_per_ray=NPTS, min_depth=MIN_D, max_depth=MAX_D)
    outs = jax.block_until_ready(outs)
    origins, directions, lengths, xys = outs

    assert origins.shape == (B, H * W, 3)
    assert directions.shape == (B, H * W, 3)
    assert lengths.shape == (B, H * W, NPTS)
    assert xys.shape == (B, H * W, 2)

    refs = _reference(R, T, focal, principal, H, W, NPTS, MIN_D, MAX_D)
    for got, want in zip(outs, refs):
        assert jnp.allclose(got, want, rtol=1e-5, atol=1e-5), "mismatch vs reference"

    # chunked path (chunk 1 of chunksize=48)
    o2, d2, l2, x2 = jax.block_until_ready(
        nerf_raysampler_forward(
            R, T, focal, principal,
            image_height=H, image_width=W,
            n_pts_per_ray=NPTS, min_depth=MIN_D, max_depth=MAX_D,
            chunksize=48, chunk_idx=1))
    sel = slice(48, 96)
    assert jnp.allclose(d2, refs[1][:, sel], rtol=1e-5, atol=1e-5)
    assert jnp.allclose(o2, refs[0][:, sel], rtol=1e-5, atol=1e-5)
    assert jnp.allclose(x2, refs[3][:, sel], rtol=1e-5, atol=1e-5)

    # channel-first fast path (skips the wrapper transpose)
    _, d_cf, _, _ = jax.block_until_ready(
        nerf_raysampler_forward(
            R, T, focal, principal,
            image_height=H, image_width=W,
            n_pts_per_ray=NPTS, min_depth=MIN_D, max_depth=MAX_D,
            channel_first=True))
    assert d_cf.shape == (B, 3, H * W)
    assert jnp.allclose(jnp.transpose(d_cf, (0, 2, 1)), refs[1], rtol=1e-5, atol=1e-5)

    print("KERNEL_OK")
</pallas_src>

<mosaic_0001>
module attributes {stable_mosaic.version = 11 : i64} {
  func.func @_dirs_kernel(%arg0: i32, %arg1: i32, %arg2: memref<26xf32, #tpu.memory_space<smem>>, %arg3: memref<2x8x128xf32, #tpu.memory_space<vmem>>, %arg4: memref<1x3x8x128xf32, #tpu.memory_space<vmem>>) attributes {dimension_semantics = [#tpu.dimension_semantics<parallel>, #tpu.dimension_semantics<parallel>], iteration_bounds = array<i64: 1, 2>, scalar_prefetch = 0 : i64, scratch_operands = 0 : i64, tpu.core_type = #tpu.core_type<tc>, window_params = [{transform_indices = @transform_0, window_bounds = array<i64: 26>}, {transform_indices = @transform_1, window_bounds = array<i64: 2, 8, 128>}, {transform_indices = @transform_2, window_bounds = array<i64: 1, 3, 8, 128>}]} {
    %c13_i32 = arith.constant 13 : i32
    %0 = arith.muli %arg1, %c13_i32 : i32
    %c0 = arith.constant 0 : index
    %c0_0 = arith.constant 0 : index
    %c0_1 = arith.constant 0 : index
    %1 = vector.load %arg3[%c0, %c0_0, %c0_1] : memref<2x8x128xf32, #tpu.memory_space<vmem>>, vector<1x8x128xf32>
    %2 = vector.shape_cast %1 : vector<1x8x128xf32> to vector<8x128xf32>
    %c1 = arith.constant 1 : index
    %c0_2 = arith.constant 0 : index
    %c0_3 = arith.constant 0 : index
    %3 = vector.load %arg3[%c1, %c0_2, %c0_3] : memref<2x8x128xf32, #tpu.memory_space<vmem>>, vector<1x8x128xf32>
    %4 = vector.shape_cast %3 : vector<1x8x128xf32> to vector<8x128xf32>
    %c9_i32 = arith.constant 9 : i32
    %5 = arith.addi %0, %c9_i32 : i32
    %6 = arith.index_cast %5 : i32 to index
    %7 = memref.load %arg2[%6] : memref<26xf32, #tpu.memory_space<smem>>
    %c10_i32 = arith.constant 10 : i32
    %8 = arith.addi %0, %c10_i32 : i32
    %9 = arith.index_cast %8 : i32 to index
    %10 = memref.load %arg2[%9] : memref<26xf32, #tpu.memory_space<smem>>
    %c11_i32 = arith.constant 11 : i32
    %11 = arith.addi %0, %c11_i32 : i32
    %12 = arith.index_cast %11 : i32 to index
    %13 = memref.load %arg2[%12] : memref<26xf32, #tpu.memory_space<smem>>
    %c12_i32 = arith.constant 12 : i32
    %14 = arith.addi %0, %c12_i32 : i32
    %15 = arith.index_cast %14 : i32 to index
    %16 = memref.load %arg2[%15] : memref<26xf32, #tpu.memory_space<smem>>
    %17 = vector.broadcast %13 : f32 to vector<8x128xf32>
    %18 = arith.subf %2, %17 : vector<8x128xf32>
    %19 = vector.broadcast %7 : f32 to vector<8x128xf32>
    %20 = arith.mulf %18, %19 : vector<8x128xf32>
    %21 = vector.broadcast %16 : f32 to vector<8x128xf32>
    %22 = arith.subf %4, %21 : vector<8x128xf32>
    %23 = vector.broadcast %10 : f32 to vector<8x128xf32>
    %24 = arith.mulf %22, %23 : vector<8x128xf32>
    %c0_i32 = arith.constant 0 : i32
    %25 = arith.addi %0, %c0_i32 : i32
    %26 = arith.index_cast %25 : i32 to index
    %27 = memref.load %arg2[%26] : memref<26xf32, #tpu.memory_space<smem>>
    %28 = vector.broadcast %27 : f32 to vector<8x128xf32>
    %29 = arith.mulf %28, %20 : vector<8x128xf32>
    %c1_i32 = arith.constant 1 : i32
    %30 = arith.addi %0, %c1_i32 : i32
    %31 = arith.index_cast %30 : i32 to index
    %32 = memref.load %arg2[%31] : memref<26xf32, #tpu.memory_space<smem>>
    %33 = vector.broadcast %32 : f32 to vector<8x128xf32>
    %34 = arith.mulf %33, %24 : vector<8x128xf32>
    %35 = arith.addf %29, %34 : vector<8x128xf32>
    %c2_i32 = arith.constant 2 : i32
    %36 = arith.addi %0, %c2_i32 : i32
    %37 = arith.index_cast %36 : i32 to index
    %38 = memref.load %arg2[%37] : memref<26xf32, #tpu.memory_space<smem>>
    %39 = vector.broadcast %38 : f32 to vector<8x128xf32>
    %40 = arith.addf %35, %39 : vector<8x128xf32>
    %c3_i32 = arith.constant 3 : i32
    %41 = arith.addi %0, %c3_i32 : i32
    %42 = arith.index_cast %41 : i32 to index
    %43 = memref.load %arg2[%42] : memref<26xf32, #tpu.memory_space<smem>>
    %44 = vector.broadcast %43 : f32 to vector<8x128xf32>
    %45 = arith.mulf %44, %20 : vector<8x128xf32>
    %c4_i32 = arith.constant 4 : i32
    %46 = arith.addi %0, %c4_i32 : i32
    %47 = arith.index_cast %46 : i32 to index
    %48 = memref.load %arg2[%47] : memref<26xf32, #tpu.memory_space<smem>>
    %49 = vector.broadcast %48 : f32 to vector<8x128xf32>
    %50 = arith.mulf %49, %24 : vector<8x128xf32>
    %51 = arith.addf %45, %50 : vector<8x128xf32>
    %c5_i32 = arith.constant 5 : i32
    %52 = arith.addi %0, %c5_i32 : i32
    %53 = arith.index_cast %52 : i32 to index
    %54 = memref.load %arg2[%53] : memref<26xf32, #tpu.memory_space<smem>>
    %55 = vector.broadcast %54 : f32 to vector<8x128xf32>
    %56 = arith.addf %51, %55 : vector<8x128xf32>
    %c6_i32 = arith.constant 6 : i32
    %57 = arith.addi %0, %c6_i32 : i32
    %58 = arith.index_cast %57 : i32 to index
    %59 = memref.load %arg2[%58] : memref<26xf32, #tpu.memory_space<smem>>
    %60 = vector.broadcast %59 : f32 to vector<8x128xf32>
    %61 = arith.mulf %60, %20 : vector<8x128xf32>
    %c7_i32 = arith.constant 7 : i32
    %62 = arith.addi %0, %c7_i32 : i32
    %63 = arith.index_cast %62 : i32 to index
    %64 = memref.load %arg2[%63] : memref<26xf32, #tpu.memory_space<smem>>
    %65 = vector.broadcast %64 : f32 to vector<8x128xf32>
    %66 = arith.mulf %65, %24 : vector<8x128xf32>
    %67 = arith.addf %61, %66 : vector<8x128xf32>
    %c8_i32 = arith.constant 8 : i32
    %68 = arith.addi %0, %c8_i32 : i32
    %69 = arith.index_cast %68 : i32 to index
    %70 = memref.load %arg2[%69] : memref<26xf32, #tpu.memory_space<smem>>
    %71 = vector.broadcast %70 : f32 to vector<8x128xf32>
    %72 = arith.addf %67, %71 : vector<8x128xf32>
    %73 = arith.mulf %40, %40 : vector<8x128xf32>
    %74 = arith.mulf %56, %56 : vector<8x128xf32>
    %75 = arith.addf %73, %74 : vector<8x128xf32>
    %76 = arith.mulf %72, %72 : vector<8x128xf32>
    %77 = arith.addf %75, %76 : vector<8x128xf32>
    %cst = arith.constant 1.000000e-24 : f32
    %78 = vector.broadcast %cst : f32 to vector<8x128xf32>
    %79 = arith.maximumf %77, %78 : vector<8x128xf32>
    %80 = math.rsqrt %79 : vector<8x128xf32>
    %81 = arith.mulf %40, %80 : vector<8x128xf32>
    %c0_4 = arith.constant 0 : index
    %c0_5 = arith.constant 0 : index
    %c0_6 = arith.constant 0 : index
    %c0_7 = arith.constant 0 : index
    %82 = vector.load %arg4[%c0_4, %c0_5, %c0_6, %c0_7] : memref<1x3x8x128xf32, #tpu.memory_space<vmem>>, vector<1x1x8x128xf32>
    %83 = vector.shape_cast %82 : vector<1x1x8x128xf32> to vector<8x128xf32>
    %84 = vector.shape_cast %81 : vector<8x128xf32> to vector<1x1x8x128xf32>
    tpu.vector_store %arg4[%c0_4, %c0_5, %c0_6, %c0_7], %84 {strides = array<i32>} : memref<1x3x8x128xf32, #tpu.memory_space<vmem>>, vector<1x1x8x128xf32>,
    %85 = arith.mulf %56, %80 : vector<8x128xf32>
    %c0_8 = arith.constant 0 : index
    %c1_9 = arith.constant 1 : index
    %c0_10 = arith.constant 0 : index
    %c0_11 = arith.constant 0 : index
    %86 = vector.load %arg4[%c0_8, %c1_9, %c0_10, %c0_11] : memref<1x3x8x128xf32, #tpu.memory_space<vmem>>, vector<1x1x8x128xf32>
    %87 = vector.shape_cast %86 : vector<1x1x8x128xf32> to vector<8x128xf32>
    %88 = vector.shape_cast %85 : vector<8x128xf32> to vector<1x1x8x128xf32>
    tpu.vector_store %arg4[%c0_8, %c1_9, %c0_10, %c0_11], %88 {strides = array<i32>} : memref<1x3x8x128xf32, #tpu.memory_space<vmem>>, vector<1x1x8x128xf32>,
    %89 = arith.mulf %72, %80 : vector<8x128xf32>
    %c0_12 = arith.constant 0 : index
    %c2 = arith.constant 2 : index
    %c0_13 = arith.constant 0 : index
    %c0_14 = arith.constant 0 : index
    %90 = vector.load %arg4[%c0_12, %c2, %c0_13, %c0_14] : memref<1x3x8x128xf32, #tpu.memory_space<vmem>>, vector<1x1x8x128xf32>
    %91 = vector.shape_cast %90 : vector<1x1x8x128xf32> to vector<8x128xf32>
    %92 = vector.shape_cast %89 : vector<8x128xf32> to vector<1x1x8x128xf32>
    tpu.vector_store %arg4[%c0_12, %c2, %c0_13, %c0_14], %92 {strides = array<i32>} : memref<1x3x8x128xf32, #tpu.memory_space<vmem>>, vector<1x1x8x128xf32>,
    return
  }
  func.func @transform_0(%arg0: i32, %arg1: i32) -> i32 {
    %c0_i32 = arith.constant 0 : i32
    %c0_i32_0 = arith.constant 0 : i32
    return %c0_i32 : i32
  }
  func.func @transform_1(%arg0: i32, %arg1: i32) -> (i32, i32, i32) {
    %c0_i32 = arith.constant 0 : i32
    %c0_i32_0 = arith.constant 0 : i32
    %c0_i32_1 = arith.constant 0 : i32
    return %c0_i32, %arg0, %c0_i32_0 : i32, i32, i32
  }
  func.func @transform_2(%arg0: i32, %arg1: i32) -> (i32, i32, i32, i32) {
    %c0_i32 = arith.constant 0 : i32
    %c0_i32_0 = arith.constant 0 : i32
    %c0_i32_1 = arith.constant 0 : i32
    return %arg1, %c0_i32, %arg0, %c0_i32_0 : i32, i32, i32, i32
  }
}

</mosaic_0001>

<llo_original>
// kernel: tpu_custom_call.1
$region0: #{tpu_custom_call.1}
  #allocation0 [shape = 'u32[]', space=smem, size = 0x4, offset = 0x4, fixed_abs, tag = 'smem constant byte address 0x4 - core index']
  #allocation1 [shape = 'u32[72,128]{1,0:T(1,128)}', space=vmem, size = 0x9000, scoped, tag = 'internal scratch']
  %s0 = inlined_call_operand.hbm [shape: f32[26], index: 0, kind: input, shape index: {}]
  %s1 = inlined_call_operand.hbm [shape: f32[2,8,128], index: 1, kind: input, shape index: {}]
  %s2 = inlined_call_operand.hbm [shape: f32[2,3,8,128], index: 2, kind: output, shape index: {}]
  %s3 = sld [smem:[#allocation0]]
  $region49: #{tpu_custom_call.1} parent=0
    _
  %s5 = ssub.s32 1, %s3
  %s6 = scalar_select 0, %s5, %s3
  $region1: #{tpu_custom_call.1} parent=0
    #allocation2 [shape = 'u8[512]{0}', space=smem, size = 0x200, scoped, tag = 'input window, operand 0, single buffered']
    #allocation3 [shape = 's32[2]{0}', space=sflag, size = 0x8, scoped, tag = 'scoped memory for tpu_custom_call.1']
    #allocation4 [shape = 's32[2]{0}', space=sflag, size = 0x8, scoped, tag = 'scoped memory for tpu_custom_call.1']
    #allocation5 [shape = 's32[2]{0}', space=sflag, size = 0x8, scoped, tag = 'scoped memory for tpu_custom_call.1']
    #allocation6 [shape = 'u8[8192]{0}', space=vmem, size = 0x2000, scoped, tag = 'input window, operand 1, single buffered']
    #allocation7 [shape = 'u8[24576]{0}', space=vmem, size = 0x6000, scoped, tag = 'output window, operand 0']
    %7 = vsyncpa [#allocation5], 0
    %8 = vsyncpa [#allocation3], 0
    %9 = vsyncpa [#allocation4], 0
    %s10 = scalar_lea.sflag [#allocation4], 1
    %11 = vsyncpa %s10, 0
    loop: start=0, step=1, limit=4
    $region2: #{tpu_custom_call.1} parent=1 // loop_pre_header
      _
    $region3: #{tpu_custom_call.1} parent=1 // loop_header
      %s13 = sphi 0, %s17
      %p14 = scmp.ge.s32.totalorder %s13, 4
      %s20 = sphi 0, %s32
      %s21 = sphi 0, %s28
      %s22 = sphi 0, %s20
      %s23 = sphi 0, %s21
      %s24 = sphi 0, %s22
      %s25 = sphi 0, %s23
      %s33 = sphi 0, %s33
      %s35 = sphi 0, %s33
      %s36 = sphi 0, %s35
      %s50 = sphi 0, %s36
      %s56 = sphi 0, %s58
      %s59 = sphi 0, %s56
      %s60 = sphi 0, %s59
      %s76 = sphi 0, %s60
      %s84 = sphi 0, %s86
      %s87 = sphi 0, %s84
      %s88 = sphi 0, %s87
      %s104 = sphi 0, %s88
    $region4: #{tpu_custom_call.1} parent=1 // loop_header_branch
      %16 = sbr.rel (%p14) target = $region8
    $region5: #{tpu_custom_call.1} parent=1 // loop_body
      %s18 = ssub.s32 %s13, 1
      %s19 = ssub.s32 %s13, 2
      %s26 = sadd.s32 1, %s21
      %p27 = scmp.ge.s32.totalorder %s26, 2
      %s28 = scalar_select %p27, 0, %s26
      %s29 = sadd.s32 1, %s20
      %s30 = scalar_select %p27, %s29, %s20
      %p31 = scmp.ge.s32.totalorder %s30, 1
      %s32 = scalar_select %p31, 0, %s30
      %s34 = sadd.s32 %s33, 1
      %p37 = scmp.eq.s32.totalorder %s13, 1
      %p38 = scmp.ne.s32.totalorder %s33, %s35
      %p39 = scmp.eq.s32.totalorder %s13, 0
      %p40 = por %p38, %p39
      %p41 = scmp.ne.s32.totalorder %s33, %s35
      %p42 = scmp.eq.s32.totalorder %s18, 1
      %p43 = por %p41, %p42
      %p44 = scmp.ne.s32.totalorder %s35, %s36
      %p45 = scmp.eq.s32.totalorder %s18, 0
      %p46 = por %p44, %p45
      %p47 = scmp.ne.s32.totalorder %s35, %s36
      %p48 = scmp.eq.s32.totalorder %s19, 1
      %p49 = por %p47, %p48
      %p51 = scmp.ne.s32.totalorder %s36, %s50
      %p52 = scmp.eq.s32.totalorder %s19, 0
      %p53 = por %p51, %p52
      %s54 = ssub.s32 %s20, %s32
      %p55 = scmp.eq.s32.totalorder %s54, 0
      %s57 = sadd.s32 %s56, 1
      %s58 = scalar_select %p55, %s56, %s57
      %p61 = pneg %p55
      %p62 = scmp.eq.s32.totalorder %s13, 1
      %p63 = por %p61, %p62
      %p64 = scmp.ne.s32.totalorder %s56, %s59
      %p65 = scmp.eq.s32.totalorder %s13, 0
      %p66 = por %p64, %p65
      %p67 = scmp.ne.s32.totalorder %s56, %s59
      %p68 = scmp.eq.s32.totalorder %s18, 1
      %p69 = por %p67, %p68
      %p70 = scmp.ne.s32.totalorder %s59, %s60
      %p71 = scmp.eq.s32.totalorder %s18, 0
      %p72 = por %p70, %p71
      %p73 = scmp.ne.s32.totalorder %s59, %s60
      %p74 = scmp.eq.s32.totalorder %s19, 1
      %p75 = por %p73, %p74
      %p77 = scmp.ne.s32.totalorder %s60, %s76
      %p78 = scmp.eq.s32.totalorder %s19, 0
      %p79 = por %p77, %p78
      %s80 = ssub.s32 %s21, %s28
      %s81 = ssub.s32 %s20, %s32
      %s82 = sor.u32 %s80, %s81
      %p83 = scmp.eq.s32.totalorder %s82, 0
      %s85 = sadd.s32 %s84, 1
      %s86 = scalar_select %p83, %s84, %s85
      %p89 = pneg %p83
      %p90 = scmp.eq.s32.totalorder %s13, 1
      %p91 = por %p89, %p90
      %p92 = scmp.ne.s32.totalorder %s84, %s87
      %p93 = scmp.eq.s32.totalorder %s13, 0
      %p94 = por %p92, %p93
      %p95 = scmp.ne.s32.totalorder %s84, %s87
      %p96 = scmp.eq.s32.totalorder %s18, 1
      %p97 = por %p95, %p96
      %p98 = scmp.ne.s32.totalorder %s87, %s88
      %p99 = scmp.eq.s32.totalorder %s18, 0
      %p100 = por %p98, %p99
      %p101 = scmp.ne.s32.totalorder %s87, %s88
      %p102 = scmp.eq.s32.totalorder %s19, 1
      %p103 = por %p101, %p102
      %p105 = scmp.ne.s32.totalorder %s88, %s104
      %p106 = scmp.eq.s32.totalorder %s19, 0
      %p107 = por %p105, %p106
      %p108 = scmp.le.s32.totalorder 1, %s13
      %p109 = scmp.lt.s32.totalorder %s13, 3
      %p110 = pnand %p108, %p109
      %p111 = pneg %p110
      // Predicated region
      $region9: #{tpu_custom_call.1} parent=5 // pred_check
        _
      $region10: #{tpu_custom_call.1} parent=5 // pred_check_branch
        %113 = sbr.rel (%p110) target = $region12
      $region11: #{tpu_custom_call.1} parent=5 // pred_region
        %s114 = ssub.s32 %s13, 1
        // Predicated region
        $region13: #{tpu_custom_call.1} parent=11 // pred_check
          %p115 = pneg %p46
        $region14: #{tpu_custom_call.1} parent=11 // pred_check_branch
          %117 = sbr.rel (%p115) target = $region16
        $region15: #{tpu_custom_call.1} parent=11 // pred_region
          %119 = vsyncadd [#allocation5], 0
          %s121 = sshll.u32 %s0, 4
          %s122 = int_to_ptr.hbm [resolvable:$true] %s121
          %124 = dma.hbm_to_smem %s122, 16, [#allocation2], [#allocation5]
        $region16: #{tpu_custom_call.1} parent=11 // pred_fallthru
          _
        // Predicated region
        $region17: #{tpu_custom_call.1} parent=11 // pred_check
          %p125 = pneg %p72
        $region18: #{tpu_custom_call.1} parent=11 // pred_check_branch
          %127 = sbr.rel (%p125) target = $region20
        $region19: #{tpu_custom_call.1} parent=11 // pred_region
          %129 = vsyncadd [#allocation3], 0
          %s130 = smul.addr %s22, 8
          %s131 = scalar_lea.hbm %s1, %s130
          %s132 = sshll.u32 %s131, 4
          %s133 = int_to_ptr.hbm [resolvable:$true] %s132
          %s134 = sshll.u32 [#allocation6], 4
          %s135 = int_to_ptr.vmem [resolvable:$true] %s134
          %140 = dma.hbm_to_vmem [thread:$0]  %s133, 256, %s135, [#allocation3], 128, 128, 8
        $region20: #{tpu_custom_call.1} parent=11 // pred_fallthru
          _
      $region12: #{tpu_custom_call.1} parent=5 // pred_fallthru
        _
      %p141 = scmp.lt.s32.totalorder %s13, 2
      // Predicated region
      $region21: #{tpu_custom_call.1} parent=5 // pred_check
        %p142 = pneg %p141
      $region22: #{tpu_custom_call.1} parent=5 // pred_check_branch
        %144 = sbr.rel (%p142) target = $region24
      $region23: #{tpu_custom_call.1} parent=5 // pred_region
        _
      $region24: #{tpu_custom_call.1} parent=5 // pred_fallthru
        _
      %p145 = scmp.le.s32.totalorder 1, %s13
      %p146 = scmp.lt.s32.totalorder %s13, 3
      %p147 = pnand %p145, %p146
      %p148 = pneg %p147
      // Predicated region
      $region25: #{tpu_custom_call.1} parent=5 // pred_check
        _
      $region26: #{tpu_custom_call.1} parent=5 // pred_check_branch
        %150 = sbr.rel (%p147) target = $region28
      $region27: #{tpu_custom_call.1} parent=5 // pred_region
        %s151 = ssub.s32 %s13, 1
        // Predicated region
        $region29: #{tpu_custom_call.1} parent=27 // pred_check
          %p152 = pneg %p46
        $region30: #{tpu_custom_call.1} parent=27 // pred_check_branch
          %154 = sbr.rel (%p152) target = $region32
        $region31: #{tpu_custom_call.1} parent=27 // pred_region
          %156 = dma.done [#allocation5], 16
        $region32: #{tpu_custom_call.1} parent=27 // pred_fallthru
          _
        // Predicated region
        $region33: #{tpu_custom_call.1} parent=27 // pred_check
          %p157 = pneg %p72
        $region34: #{tpu_custom_call.1} parent=27 // pred_check_branch
          %159 = sbr.rel (%p157) target = $region36
        $region35: #{tpu_custom_call.1} parent=27 // pred_region
          %161 = dma.done [#allocation3], 256
        $region36: #{tpu_custom_call.1} parent=27 // pred_fallthru
          _
        %162 = sfence
        %p163 = pneg %p46
        %p164 = pneg %p43
        %p165 = pneg %p72
        %p166 = pneg %p69
        %p167 = pneg %p100
        %p168 = pneg %p97
        %s169 = sand.u32 %s87, 1
        %s170 = scalar_lea.sflag [#allocation4], %s169
        %s171 = sand.u32 %s87, 1
        %s172 = smul.addr %s171, 24
        %s173 = scalar_lea.vmem [#allocation7], %s172
        %s174 = smul.u32 %s23, 13
        %v175 = vld [vmem:[#allocation6] sm:$0xff]
        %s176 = scalar_lea.vmem [#allocation6], 8
        %v177 = vld [vmem:[%s176] sm:$0xff]
        %s178 = sadd.s32 %s174, 9
        %s179 = sld [smem:[#allocation2 + %s178]]
        %s180 = sadd.s32 %s174, 10
        %s181 = sld [smem:[#allocation2 + %s180]]
        %s182 = sadd.s32 %s174, 11
        %s183 = sld [smem:[#allocation2 + %s182]]
        %s184 = sadd.s32 %s174, 12
        %s185 = sld [smem:[#allocation2 + %s184]]
        %v186 = vstv %s183
        %v187 = vsub.f32 %v175, %v186
        %v188 = vstv %s179
        %v189 = vmul.f32 %v187, %v188
        %v190 = vstv %s185
        %v191 = vsub.f32 %v177, %v190
        %v192 = vstv %s181
        %v193 = vmul.f32 %v191, %v192
        %s194 = sld [smem:[#allocation2 + %s174]]
        %v195 = vstv %s194
        %v196 = vmul.f32 %v195, %v189
        %s197 = sadd.s32 %s174, 1
        %s198 = sld [smem:[#allocation2 + %s197]]
        %v199 = vstv %s198
        %v200 = vmul.f32 %v199, %v193
        %v201 = vadd.f32 %v196, %v200
        %s202 = sadd.s32 %s174, 2
        %s203 = sld [smem:[#allocation2 + %s202]]
        %v204 = vstv %s203
        %v205 = vadd.f32 %v201, %v204
        %s206 = sadd.s32 %s174, 3
        %s207 = sld [smem:[#allocation2 + %s206]]
        %v208 = vstv %s207
        %v209 = vmul.f32 %v208, %v189
        %s210 = sadd.s32 %s174, 4
        %s211 = sld [smem:[#allocation2 + %s210]]
        %v212 = vstv %s211
        %v213 = vmul.f32 %v212, %v193
        %v214 = vadd.f32 %v209, %v213
        %s215 = sadd.s32 %s174, 5
        %s216 = sld [smem:[#allocation2 + %s215]]
        %v217 = vstv %s216
        %v218 = vadd.f32 %v214, %v217
        %s219 = sadd.s32 %s174, 6
        %s220 = sld [smem:[#allocation2 + %s219]]
        %v221 = vstv %s220
        %v222 = vmul.f32 %v221, %v189
        %s223 = sadd.s32 %s174, 7
        %s224 = sld [smem:[#allocation2 + %s223]]
        %v225 = vstv %s224
        %v226 = vmul.f32 %v225, %v193
        %v227 = vadd.f32 %v222, %v226
        %s228 = sadd.s32 %s174, 8
        %s229 = sld [smem:[#allocation2 + %s228]]
        %v230 = vstv %s229
        %v231 = vadd.f32 %v227, %v230
        %v232 = vmul.f32 %v205, %v205
        %v233 = vmul.f32 %v218, %v218
        %v234 = vadd.f32 %v232, %v233
        %v235 = vmul.f32 %v231, %v231
        %v236 = vadd.f32 %v234, %v235
        %v237 = vmax.f32 %v236, 1e-24
        %v238 = vrsqrt.pop %v237
        %v239 = vmul.f32 %v238, %v237
        %v240 = vmul.f32 %v239, %v238
        %v241 = vmul.f32 0.5, %v240
        %v242 = vsub.f32 1.5, %v241
        %v243 = vmul.f32 %v238, %v242
        %vm244 = vweird.f32 %v237
        %vm245 = vweird.f32 %v238
        %vm246 = vmor %vm244, %vm245
        %v247 = vsel %vm246, %v238, %v243
        %v248 = vmul.f32 %v205, %v247
        %249 = vst [vmem:[%s173] sm:$0xff] %v248
        %v250 = vmul.f32 %v218, %v247
        %s251 = scalar_lea.vmem %s173, 8 [#allocation7]
        %252 = vst [vmem:[%s251] sm:$0xff] %v250
        %v253 = vmul.f32 %v231, %v247
        %s254 = scalar_lea.vmem %s173, 16 [#allocation7]
        %255 = vst [vmem:[%s254] sm:$0xff] %v253
        %s256 = sand.u32 %s87, 1
        %s257 = scalar_lea.sflag [#allocation4], %s256
        %s258 = sand.u32 %s87, 1
        %s259 = smul.addr %s258, 24
        %s260 = scalar_lea.vmem [#allocation7], %s259
        // Predicated region
        $region37: #{tpu_custom_call.1} parent=27 // pred_check
          %p261 = pneg %p97
        $region38: #{tpu_custom_call.1} parent=27 // pred_check_branch
          %263 = sbr.rel (%p261) target = $region40
        $region39: #{tpu_custom_call.1} parent=27 // pred_region
          %265 = vsyncadd %s257, 0
          %s266 = smul.addr %s23, 3
          %s267 = sadd.s32 %s22, %s266
          %s268 = smul.addr %s267, 8
          %s269 = scalar_lea.hbm %s2, %s268
          %s270 = sshll.u32 %s260, 4
          %s271 = int_to_ptr.vmem [resolvable:$true] %s270
          %s272 = sshll.u32 %s269, 4
          %s273 = int_to_ptr.hbm [resolvable:$true] %s272
          %278 = dma.vmem_to_hbm [thread:$0]  %s271, 384, %s273, %s257, 128, 128, 8
        $region40: #{tpu_custom_call.1} parent=27 // pred_fallthru
          _
      $region28: #{tpu_custom_call.1} parent=5 // pred_fallthru
        _
      %p279 = scmp.le.s32.totalorder 2, %s13
      // Predicated region
      $region41: #{tpu_custom_call.1} parent=5 // pred_check
        %p280 = pneg %p279
      $region42: #{tpu_custom_call.1} parent=5 // pred_check_branch
        %282 = sbr.rel (%p280) target = $region44
      $region43: #{tpu_custom_call.1} parent=5 // pred_region
        %s283 = ssub.s32 %s13, 2
        // Predicated region
        $region45: #{tpu_custom_call.1} parent=43 // pred_check
          %p284 = pneg %p103
        $region46: #{tpu_custom_call.1} parent=43 // pred_check_branch
          %286 = sbr.rel (%p284) target = $region48
        $region47: #{tpu_custom_call.1} parent=43 // pred_region
          %s287 = sand.u32 %s88, 1
          %s288 = scalar_lea.sflag [#allocation4], %s287
          %s289 = sand.u32 %s88, 1
          %s290 = smul.addr %s289, 24
          %s291 = scalar_lea.vmem [#allocation7], %s290
          %293 = dma.done %s288, 384
        $region48: #{tpu_custom_call.1} parent=43 // pred_fallthru
          _
      $region44: #{tpu_custom_call.1} parent=5 // pred_fallthru
        _
    $region6: #{tpu_custom_call.1} parent=1 // loop_footer
      %s17 = sadd.s32 1, %s13
    $region7: #{tpu_custom_call.1} parent=1 // loop_footer_branch
      %12 = sbr.rel target = $region3
    $region8: #{tpu_custom_call.1} parent=1 // loop_exit
      _
    %294 = vsyncpa [#allocation3], 1
    %s295 = scalar_lea.sflag [#allocation3], 1
    %296 = vsyncpa %s295, 1
    %297 = vsyncpa [#allocation4], 1
    %s298 = scalar_lea.sflag [#allocation4], 1
    %299 = vsyncpa %s298, 1
    %300 = vsyncpa [#allocation5], 1
    %s301 = scalar_lea.sflag [#allocation5], 1
    %302 = vsyncpa %s301, 1

</llo_original>
